<compile_context>
chip_gen: v5e
topology: v5e:2x2
jax: 0.10.0
libtpu: 0.0.40
codegen_flags: <defaults>
</compile_context>

<pallas_src>
import jax
import jax.numpy as jnp
from jax.experimental import pallas as pl
from jax.experimental.pallas import tpu as pltpu


def _round_up(n, m):
    return ((n + m - 1) // m) * m


def _net_kernel(x_ref, w1_ref, bw_ref, b2_ref, o_ref):
    # x: (TB, D) f32   w1: (D, Hp) f32   bw: (2, Hp) [row 0 = b1, row 1 = w2]
    # b2: (1, 1) scalar in SMEM          o: (TB, 1) f32
    h = jnp.dot(x_ref[...], w1_ref[...], preferred_element_type=jnp.float32)
    h = jnp.maximum(h + bw_ref[0:1, :], 0.0)                 # relu(x @ W1 + b1)
    # fc2: elementwise multiply + cross-lane sum (VPU + XLU; MXU stays out of it)
    out = jnp.sum(h * bw_ref[1:2, :], axis=-1, keepdims=True) + b2_ref[0, 0]
    o_ref[...] = out.astype(o_ref.dtype)


def net_forward(x, w1, b1, w2, b2, *, tile_b=4096):
    """Forward pass of Net: relu(x @ w1 + b1) @ w2 + b2 for x of shape (B, D)."""
    x = jnp.asarray(x, jnp.float32)
    B, D = x.shape
    H = w1.shape[1]
    Hp = _round_up(H, 128)  # 100 -> 128: full 128-lane vregs, unmasked ops

    # Pack parameters: zero-padded W1, one (2, Hp) slab holding [b1; w2], b2 scalar.
    w1p = jnp.zeros((D, Hp), jnp.float32).at[:, :H].set(jnp.asarray(w1, jnp.float32))
    bw = jnp.zeros((2, Hp), jnp.float32)
    bw = bw.at[0, :H].set(jnp.reshape(jnp.asarray(b1, jnp.float32), (H,)))
    bw = bw.at[1, :H].set(jnp.reshape(jnp.asarray(w2, jnp.float32), (H,)))
    b2s = jnp.reshape(jnp.asarray(b2, jnp.float32), (1, 1))

    # Batch tiling: no host-side padding of x.  Block batch dim must be
    # 8-aligned; the last (possibly partial) block is masked by Pallas.
    tile_b = max(8, min(tile_b, _round_up(B, 8)))
    tile_b = _round_up(tile_b, 8)
    num_blocks = pl.cdiv(B, tile_b)

    cost = pl.CostEstimate(
        flops=2 * B * D * Hp + 3 * B * Hp,
        transcendentals=0,
        bytes_accessed=4 * (B * D + D * Hp + 2 * Hp + 1 + B),
    )

    out = pl.pallas_call(
        _net_kernel,
        out_shape=jax.ShapeDtypeStruct((B, 1), jnp.float32),
        grid=(num_blocks,),
        in_specs=[
            pl.BlockSpec((tile_b, D), lambda i: (i, 0)),        # x: streamed per tile
            pl.BlockSpec((D, Hp), lambda i: (0, 0)),            # W1: resident
            pl.BlockSpec((2, Hp), lambda i: (0, 0)),            # [b1; w2]: resident
            pl.BlockSpec(memory_space=pltpu.MemorySpace.SMEM),  # b2 scalar in SMEM
        ],
        out_specs=pl.BlockSpec((tile_b, 1), lambda i: (i, 0)),
        compiler_params=pltpu.CompilerParams(
            dimension_semantics=("parallel",),   # megacore sharding on v7x
            vmem_limit_bytes=32 * 1024 * 1024,   # headroom for 4K-row tiles on v5e
        ),
        cost_estimate=cost,
    )(x, w1p, bw, b2s)
    return out


def init_params(key, input_size, hidden=100):
    # Deterministic synthetic init (mimics nn.Linear uniform(-1/sqrt(fan_in), ...)).
    k1, k2, k3, k4 = jax.random.split(key, 4)
    lim1 = 1.0 / jnp.sqrt(jnp.float32(input_size))
    lim2 = 1.0 / jnp.sqrt(jnp.float32(hidden))
    w1 = jax.random.uniform(k1, (input_size, hidden), jnp.float32, -lim1, lim1)
    b1 = jax.random.uniform(k2, (hidden,), jnp.float32, -lim1, lim1)
    w2 = jax.random.uniform(k3, (hidden,), jnp.float32, -lim2, lim2)
    b2 = jax.random.uniform(k4, (), jnp.float32, -lim2, lim2)
    return w1, b1, w2, b2


if __name__ == "__main__":
    key = jax.random.PRNGKey(0)
    kx, kp, kx2, kx3 = jax.random.split(key, 4)

    input_size = 12  # Pawpularity metadata feature count
    hidden = 100

    w1, b1, w2, b2 = init_params(kp, input_size, hidden)

    def ref_fn(xv):
        return jnp.maximum(xv @ w1 + b1, 0.0) @ w2.reshape(hidden, 1) + b2

    # Small batch (single full block).
    x = jax.random.normal(kx, (8, input_size), jnp.float32)
    out = jax.block_until_ready(net_forward(x, w1, b1, w2, b2))
    assert out.shape == (8, 1)
    assert jnp.allclose(out, ref_fn(x), atol=1e-5, rtol=1e-5)

    # Batch not a multiple of 8 (exercises the masked partial block).
    x2 = jax.random.normal(kx2, (37, input_size), jnp.float32)
    out2 = jax.block_until_ready(net_forward(x2, w1, b1, w2, b2))
    assert out2.shape == (37, 1)
    assert jnp.allclose(out2, ref_fn(x2), atol=1e-5, rtol=1e-5)

    # Multi-block grid with a partial tail block (no host-side padding of x).
    x3 = jax.random.normal(kx3, (4100, input_size), jnp.float32)
    out3 = jax.block_until_ready(net_forward(x3, w1, b1, w2, b2))
    assert out3.shape == (4100, 1)
    assert jnp.allclose(out3, ref_fn(x3), atol=1e-5, rtol=1e-5)

    print("KERNEL_OK")
</pallas_src>

<mosaic_0001>
module attributes {stable_mosaic.version = 11 : i64} {
  func.func @_net_kernel(%arg0: i32, %arg1: memref<8x12xf32, #tpu.memory_space<vmem>>, %arg2: memref<12x128xf32, #tpu.memory_space<vmem>>, %arg3: memref<2x128xf32, #tpu.memory_space<vmem>>, %arg4: memref<1x1xf32, #tpu.memory_space<smem>>, %arg5: memref<8x1xf32, #tpu.memory_space<vmem>>) attributes {dimension_semantics = [#tpu.dimension_semantics<parallel>], iteration_bounds = array<i64: 1>, scalar_prefetch = 0 : i64, scratch_operands = 0 : i64, tpu.core_type = #tpu.core_type<tc>, window_params = [{transform_indices = @transform_0, window_bounds = array<i64: 8, 12>}, {pipeline_mode = #tpu.pipeline_mode<synchronous>, transform_indices = @transform_1, window_bounds = array<i64: 12, 128>}, {pipeline_mode = #tpu.pipeline_mode<synchronous>, transform_indices = @transform_2, window_bounds = array<i64: 2, 128>}, {transform_indices = @transform_3, window_bounds = array<i64: 1, 1>}, {transform_indices = @transform_4, window_bounds = array<i64: 8, 1>}]} {
    %c0 = arith.constant 0 : index
    %c0_0 = arith.constant 0 : index
    %0 = vector.load %arg1[%c0, %c0_0] : memref<8x12xf32, #tpu.memory_space<vmem>>, vector<8x12xf32>
    %c0_1 = arith.constant 0 : index
    %c0_2 = arith.constant 0 : index
    %1 = vector.load %arg2[%c0_1, %c0_2] : memref<12x128xf32, #tpu.memory_space<vmem>>, vector<12x128xf32>
    %cst = arith.constant dense<0.000000e+00> : vector<8x128xf32>
    %2 = tpu.matmul %0, %1, %cst {dimension_numbers = #tpu.dot_dimension_numbers<[1], [0], [0], [1], [0, 0, 1, 1], [], []>} : vector<8x12xf32>, vector<12x128xf32>, vector<8x128xf32> -> vector<8x128xf32>
    %c0_3 = arith.constant 0 : index
    %c0_4 = arith.constant 0 : index
    %3 = vector.load %arg3[%c0_3, %c0_4] : memref<2x128xf32, #tpu.memory_space<vmem>>, vector<1x128xf32>
    %4 = vector.broadcast %3 : vector<1x128xf32> to vector<8x128xf32>
    %5 = arith.addf %2, %4 : vector<8x128xf32>
    %cst_5 = arith.constant 0.000000e+00 : f32
    %6 = vector.broadcast %cst_5 : f32 to vector<8x128xf32>
    %7 = arith.maximumf %5, %6 : vector<8x128xf32>
    %c1 = arith.constant 1 : index
    %c0_6 = arith.constant 0 : index
    %8 = vector.load %arg3[%c1, %c0_6] : memref<2x128xf32, #tpu.memory_space<vmem>>, vector<1x128xf32>
    %9 = vector.broadcast %8 : vector<1x128xf32> to vector<8x128xf32>
    %10 = arith.mulf %7, %9 : vector<8x128xf32>
    %cst_7 = arith.constant dense<0.000000e+00> : vector<8xf32>
    %11 = vector.multi_reduction <add>, %10, %cst_7 [1] : vector<8x128xf32> to vector<8xf32>
    %12 = vector.shape_cast %11 : vector<8xf32> to vector<8x1xf32>
    %c0_8 = arith.constant 0 : index
    %c0_9 = arith.constant 0 : index
    %13 = memref.load %arg4[%c0_8, %c0_9] : memref<1x1xf32, #tpu.memory_space<smem>>
    %14 = vector.broadcast %13 : f32 to vector<8x1xf32>
    %15 = arith.addf %12, %14 : vector<8x1xf32>
    %c0_10 = arith.constant 0 : index
    %c0_11 = arith.constant 0 : index
    %16 = vector.load %arg5[%c0_10, %c0_11] : memref<8x1xf32, #tpu.memory_space<vmem>>, vector<8x1xf32>
    tpu.vector_store %arg5[%c0_10, %c0_11], %15 {strides = array<i32>} : memref<8x1xf32, #tpu.memory_space<vmem>>, vector<8x1xf32>,
    return
  }
  func.func @transform_0(%arg0: i32) -> (i32, i32) {
    %c0_i32 = arith.constant 0 : i32
    %c0_i32_0 = arith.constant 0 : i32
    return %arg0, %c0_i32 : i32, i32
  }
  func.func @transform_1(%arg0: i32) -> (i32, i32) {
    %c0_i32 = arith.constant 0 : i32
    %c0_i32_0 = arith.constant 0 : i32
    %c0_i32_1 = arith.constant 0 : i32
    return %c0_i32, %c0_i32_0 : i32, i32
  }
  func.func @transform_2(%arg0: i32) -> (i32, i32) {
    %c0_i32 = arith.constant 0 : i32
    %c0_i32_0 = arith.constant 0 : i32
    %c0_i32_1 = arith.constant 0 : i32
    return %c0_i32, %c0_i32_0 : i32, i32
  }
  func.func @transform_3(%arg0: i32) -> (i32, i32) {
    %c0_i32 = arith.constant 0 : i32
    %c0_i32_0 = arith.constant 0 : i32
    %c0_i32_1 = arith.constant 0 : i32
    return %c0_i32, %c0_i32_0 : i32, i32
  }
  func.func @transform_4(%arg0: i32) -> (i32, i32) {
    %c0_i32 = arith.constant 0 : i32
    %c0_i32_0 = arith.constant 0 : i32
    return %arg0, %c0_i32 : i32, i32
  }
}

</mosaic_0001>

<llo_original>
// kernel: tpu_custom_call.1
$region0: #{tpu_custom_call.1}
  #allocation0 [shape = 'u32[]', space=smem, size = 0x4, offset = 0x4, fixed_abs, tag = 'smem constant byte address 0x4 - core index']
  #allocation1 [shape = 'u32[72,128]{1,0:T(1,128)}', space=vmem, size = 0x9000, scoped, tag = 'internal scratch']
  #allocation2 [shape = 'f32[1,1]{1,0:T(1,128)S(6)}', space=smem, size = 0x200, scoped, tag = 'scoped memory for tpu_custom_call.1']
  %s0 = inlined_call_operand.hbm [shape: f32[8,12], index: 0, kind: input, shape index: {}]
  %s1 = inlined_call_operand.hbm [shape: f32[12,128], index: 1, kind: input, shape index: {}]
  %s2 = inlined_call_operand.vmem [shape: f32[2,128], index: 2, kind: input, shape index: {}]
  %s3 = inlined_call_operand.<no memory space> [shape: f32[1,1], index: 3, kind: input, shape index: {}]
  %s4 = inlined_call_operand.vmem [shape: f32[8,1], index: 4, kind: output, shape index: {}]
  %s5 = sld [smem:[#allocation0]]
  $region34: #{tpu_custom_call.1} parent=0
    _
  %s7 = ssub.s32 1, %s5
  %s8 = scalar_select 0, %s7, %s5
  %9 = sst [smem:[#allocation2]] %s3
  $region1: #{tpu_custom_call.1} parent=0
    #allocation3 [shape = 'u8[4096]{0}', space=vmem, size = 0x1000, scoped, tag = 'input window, operand 0, single buffered']
    #allocation4 [shape = 's32[1]{0}', space=sflag, size = 0x4, scoped, tag = 'scoped memory for tpu_custom_call.1']
    #allocation5 [shape = 'u8[8192]{0}', space=vmem, size = 0x2000, scoped, tag = 'input window, operand 1, single buffered']
    #allocation6 [shape = 's32[1]{0}', space=sflag, size = 0x4, scoped, tag = 'scoped memory for tpu_custom_call.1']
    %10 = vsyncpa [#allocation4], 0
    %11 = vsyncpa [#allocation6], 0
    // Predicated region
    $region2: #{tpu_custom_call.1} parent=1 // pred_check
      _
    $region3: #{tpu_custom_call.1} parent=1 // pred_check_branch
      %13 = sbr.rel (0) target = $region5
    $region4: #{tpu_custom_call.1} parent=1 // pred_region
      %15 = vsyncadd [#allocation4], 0
      %s17 = sshll.u32 %s0, 4
      %s18 = int_to_ptr.hbm [resolvable:$true] %s17
      %s19 = sshll.u32 [#allocation3], 4
      %s20 = int_to_ptr.vmem [resolvable:$true] %s19
      %22 = dma.hbm_to_vmem [thread:$0]  %s18, 128, %s20, [#allocation4]
    $region5: #{tpu_custom_call.1} parent=1 // pred_fallthru
      _
    // Predicated region
    $region6: #{tpu_custom_call.1} parent=1 // pred_check
      _
    $region7: #{tpu_custom_call.1} parent=1 // pred_check_branch
      %24 = sbr.rel (0) target = $region9
    $region8: #{tpu_custom_call.1} parent=1 // pred_region
      %26 = vsyncadd [#allocation6], 0
      %s27 = sshll.u32 %s1, 4
      %s28 = int_to_ptr.hbm [resolvable:$true] %s27
      %s29 = sshll.u32 [#allocation5], 4
      %s30 = int_to_ptr.vmem [resolvable:$true] %s29
      %35 = dma.hbm_to_vmem [thread:$0]  %s28, 256, %s30, [#allocation6], 128, 128, 8
    $region9: #{tpu_custom_call.1} parent=1 // pred_fallthru
      _
    // Predicated region
    $region10: #{tpu_custom_call.1} parent=1 // pred_check
      _
    $region11: #{tpu_custom_call.1} parent=1 // pred_check_branch
      %37 = sbr.rel (0) target = $region13
    $region12: #{tpu_custom_call.1} parent=1 // pred_region
      _
    $region13: #{tpu_custom_call.1} parent=1 // pred_fallthru
      _
    // Predicated region
    $region14: #{tpu_custom_call.1} parent=1 // pred_check
      _
    $region15: #{tpu_custom_call.1} parent=1 // pred_check_branch
      %39 = sbr.rel (0) target = $region17
    $region16: #{tpu_custom_call.1} parent=1 // pred_region
      _
    $region17: #{tpu_custom_call.1} parent=1 // pred_fallthru
      _
    // Predicated region
    $region18: #{tpu_custom_call.1} parent=1 // pred_check
      _
    $region19: #{tpu_custom_call.1} parent=1 // pred_check_branch
      %41 = sbr.rel (0) target = $region21
    $region20: #{tpu_custom_call.1} parent=1 // pred_region
      %43 = dma.done [#allocation4], 128
    $region21: #{tpu_custom_call.1} parent=1 // pred_fallthru
      _
    // Predicated region
    $region22: #{tpu_custom_call.1} parent=1 // pred_check
      _
    $region23: #{tpu_custom_call.1} parent=1 // pred_check_branch
      %45 = sbr.rel (0) target = $region25
    $region24: #{tpu_custom_call.1} parent=1 // pred_region
      %47 = dma.done [#allocation6], 256
    $region25: #{tpu_custom_call.1} parent=1 // pred_fallthru
      _
    %v48 = vld [vmem:[#allocation3] sm:$0xff]
    %v49 = vld [vmem:[#allocation5] sm:$0xff]
    %v50 = vld [vmem:[#allocation5 + $0x8] sm:$0xf]
    %v51 = vld [vmem:[%s2] sm:$0x1]
    %v52 = vperm.slane %v51, 0
    %vm53 = vcmask 97280
    %v55 = vsel %vm53, %v48, 0
    %vm57 = vcmask 1043456
    %v59 = vsel %vm57, %v50, 0
    %61 = vmatpush.msra.mxu0 0.0
    %62 = vmatpush.msra.mxu0 0.0
    %63 = vmatpush.msra.mxu0 0.0
    %64 = vmatpush.msra.mxu0 0.0
    %65 = vmatpush.msra.mxu0 0.0
    %66 = vmatpush.msra.mxu0 0.0
    %67 = vmatpush.msra.mxu0 0.0
    %68 = vmatpush.msra.mxu0 0.0
    %69 = vmatpush.msra.mxu0 0.0
    %70 = vmatpush.msra.mxu0 0.0
    %71 = vmatpush.msra.mxu0 0.0
    %72 = vmatpush.msra.mxu0 0.0
    %73 = vmatpush.msra.mxu0 0.0
    %74 = vmatpush.msra.mxu0 0.0
    %75 = vmatpush.msra.mxu0 %v59
    %76 = vmatpush.msra.mxu0 %v49
    %77 = vmatmul.f32.gmra.mxu0 %v55
    %v78 = vpop.f32.mrf.mxu0
    %v79 = vadd.f32 %v52, %v78
    %80 = vdwg.mxu0
    %v81 = vmax.f32 %v79, 0.0
    %v82 = vld [vmem:[%s2 + $0x1] sm:$0x1]
    %v83 = vperm.slane %v82, 0
    %v84 = vmul.f32 %v81, %v83
    %85 = vadd.xlane.f32.xlu0 %v84
    %v86 = vpop.xlane.xlu0 %85
    %s87 = sld [smem:[#allocation2]]
    %v88 = vstv %s87
    %v89 = vadd.f32 %v86, %v88
    %vm90 = vcmask 7168
    %91 = vst.msk [vmem:[%s4] sm:$0xff] %vm90, %v89
    // Predicated region
    $region26: #{tpu_custom_call.1} parent=1 // pred_check
      _
    $region27: #{tpu_custom_call.1} parent=1 // pred_check_branch
      %93 = sbr.rel (0) target = $region29
    $region28: #{tpu_custom_call.1} parent=1 // pred_region
      _
    $region29: #{tpu_custom_call.1} parent=1 // pred_fallthru
      _
    // Predicated region
    $region30: #{tpu_custom_call.1} parent=1 // pred_check
      _
    $region31: #{tpu_custom_call.1} parent=1 // pred_check_branch
      %95 = sbr.rel (0) target = $region33
    $region32: #{tpu_custom_call.1} parent=1 // pred_region
      _
    $region33: #{tpu_custom_call.1} parent=1 // pred_fallthru
      _
    %96 = vsyncpa [#allocation4], 1
    %97 = vsyncpa [#allocation6], 1

</llo_original>
